<compile_context>
chip_gen: v6e
topology: v6e:2x2x1
jax: 0.10.0
libtpu: 0.0.40
codegen_flags: <defaults>
</compile_context>

<pallas_src>
import jax
import jax.numpy as jnp
from jax.experimental import pallas as pl
from jax.experimental.pallas import tpu as pltpu

# ---- packed-parameter slab layout (rows x 128 lanes, f32) -------------------
IN_F = 10          # fc1 in_features
HID = 50           # hidden size
LANES = 128        # native lane width; hidden 50 is zero-padded to 128

W2T_ROW = 0        # rows [0, 128)   : fc2 weight stored TRANSPOSED (out, in), padded
W1_ROW = 128       # rows [128, 138) : fc1 weight (in=10, out) , lanes 50.. zero
W3_ROW = 144       # rows [144, 152) : fc3 weight as a single row at 144 (+7 zero rows)
B3_ROW = 152       # row 152         : fc3 bias scalar at lane 0
BCOL_ROW = 160     # rows [160, 288) : bias COLUMNS: lane 0 = b1, lane 1 = b2 (rows 0..49)
SLAB_ROWS = 288    # multiple of 8 sublanes; 288*128*4 B ~= 144 KB, VMEM-resident

# Lane/row padding invariants (all guaranteed by the zero-initialized slab):
#   w1 lanes 50..127 == 0, w2t rows/lanes beyond 50 == 0, bias columns rows 50..127 == 0,
#   w3 row lanes 50..127 == 0 and rows 145..151 == 0.
# These keep the padded hidden rows of h1/h2 exactly 0 through ReLU, so fc2/fc3
# never pick up garbage. Any slab-layout change must preserve them.


def mlp_kernel(xT_ref, p_ref, o_ref):
    xT = xT_ref[...]                                      # (10, TB) f32, batch on lanes

    w1 = p_ref[W1_ROW:W1_ROW + IN_F, :]                   # (10, 128)   fc1 (in, out)
    w2t = p_ref[W2T_ROW:W2T_ROW + LANES, :]               # (128, 128)  fc2 (out, in)
    w3b = p_ref[W3_ROW:W3_ROW + 8, :]                     # (8, 128)    fc3 row + 7 zero rows
    b3 = p_ref[B3_ROW:B3_ROW + 1, 0:1]                    # (1, 1)
    b1c = p_ref[BCOL_ROW:BCOL_ROW + LANES, 0:1]           # (128, 1)    bias as column
    b2c = p_ref[BCOL_ROW:BCOL_ROW + LANES, 1:2]           # (128, 1)

    # fc1 + ReLU (MXU): contract over the 10 input features, batch stays lane-dense.
    h1 = jnp.maximum(
        jax.lax.dot_general(w1, xT, (((0,), (0,)), ((), ())),
                            preferred_element_type=jnp.float32) + b1c, 0.0)   # (128, TB)
    # fc2 + ReLU (MXU): standard (128,128) @ (128,TB), N = TB fills the MXU.
    h2 = jnp.maximum(
        jnp.dot(w2t, h1, preferred_element_type=jnp.float32) + b2c, 0.0)      # (128, TB)
    # fc3 as an MXU row-matmul -> lane-dense (1, TB); no XLU cross-lane reduce.
    y8 = jnp.dot(w3b, h2, preferred_element_type=jnp.float32)                 # (8, TB)
    o_ref[...] = (y8[0:1, :] + b3).astype(o_ref.dtype)                        # (1, TB)


def pack_params(params):
    """Pack w1,b1,w2,b2,w3,b3 into one (288, 128) f32 slab (done once at init)."""
    slab = jnp.zeros((SLAB_ROWS, LANES), jnp.float32)
    slab = slab.at[W2T_ROW:W2T_ROW + HID, 0:HID].set(params["w2"].T)      # fc2 (out,in)
    slab = slab.at[W1_ROW:W1_ROW + IN_F, 0:HID].set(params["w1"])         # fc1 (in,out)
    slab = slab.at[W3_ROW, 0:HID].set(params["w3"][:, 0])                 # fc3 row
    slab = slab.at[B3_ROW, 0].set(params["b3"][0, 0])                     # fc3 bias
    slab = slab.at[BCOL_ROW:BCOL_ROW + HID, 0].set(params["b1"][0])       # b1 column
    slab = slab.at[BCOL_ROW:BCOL_ROW + HID, 1].set(params["b2"][0])       # b2 column
    return slab


def _choose_tile(B, max_tb):
    """Batch tile: multiple of 128 lanes, >=2 grid steps when B > 128 (v7x TCs),
    sized to ceil(B / n_steps) so large B uses few fat steps with little waste."""
    max_tb = max(128, (max_tb // 128) * 128)
    n_steps = max(1, -(-B // max_tb))
    if B > 128:
        n_steps = max(n_steps, 2)
    tb = -(-B // n_steps)
    tb = ((tb + 127) // 128) * 128
    return max(128, min(tb, max_tb))


def mydnn_forward(x, slab, *, max_tb=2048):
    """x: (B, 10) f32, slab: packed params (288, 128) f32. Returns (B, 1) f32.

    NOTE: a NARMA driver should concatenate ALL timesteps into ONE call here
    (one pallas_call); per-timestep calls would be launch-overhead dominated.
    """
    B, F = x.shape
    assert F == IN_F, f"expected {IN_F} input features, got {F}"

    tb = _choose_tile(B, max_tb)
    b_pad = ((B + tb - 1) // tb) * tb

    # Batch onto the lane axis (lane-dense input). A real driver would build xT
    # directly; here the transpose is a cheap one-off XLA op outside the kernel.
    xT = jnp.transpose(x)                       # (10, B)
    if b_pad != B:
        xT = jnp.pad(xT, ((0, 0), (0, b_pad - B)))

    out = pl.pallas_call(
        mlp_kernel,
        out_shape=jax.ShapeDtypeStruct((1, b_pad), jnp.float32),
        grid_spec=pltpu.PrefetchScalarGridSpec(
            num_scalar_prefetch=0,
            grid=(b_pad // tb,),
            in_specs=[
                pl.BlockSpec((IN_F, tb), lambda i: (0, i)),            # x tile per step
                pl.BlockSpec((SLAB_ROWS, LANES), lambda i: (0, 0)),    # params resident
            ],
            out_specs=pl.BlockSpec((1, tb), lambda i: (0, i)),         # lane-dense output
        ),
        compiler_params=pltpu.CompilerParams(
            dimension_semantics=("parallel",),   # lets v7x split the batch across both TCs
        ),
    )(xT, slab)

    # Padded batch columns hold relu(bias)-propagated garbage -> slice them off.
    return out[0, :B].reshape(B, 1)


def init_params(key, input_size=10, hidden_size=50, output_size=1):
    """Deterministic init mimicking nn.Linear's uniform(-1/sqrt(fan_in), ...)."""
    ks = jax.random.split(key, 6)

    def linear(kw, kb, fan_in, fan_out):
        bound = 1.0 / jnp.sqrt(jnp.float32(fan_in))
        w = jax.random.uniform(kw, (fan_in, fan_out), jnp.float32, -bound, bound)
        b = jax.random.uniform(kb, (1, fan_out), jnp.float32, -bound, bound)
        return w, b

    w1, b1 = linear(ks[0], ks[1], input_size, hidden_size)
    w2, b2 = linear(ks[2], ks[3], hidden_size, hidden_size)
    w3, b3 = linear(ks[4], ks[5], hidden_size, output_size)
    return {"w1": w1, "b1": b1, "w2": w2, "b2": b2, "w3": w3, "b3": b3}


def reference_forward(x, p):
    h1 = jnp.maximum(x @ p["w1"] + p["b1"], 0.0)
    h2 = jnp.maximum(h1 @ p["w2"] + p["b2"], 0.0)
    return h2 @ p["w3"] + p["b3"]


if __name__ == "__main__":
    key = jax.random.PRNGKey(0)
    k_param, k_x = jax.random.split(key)

    input_size, hidden_size, output_size = 10, 50, 1
    params = init_params(k_param, input_size, hidden_size, output_size)
    slab = pack_params(params)

    # Main case: all NARMA timesteps batched into ONE pallas_call.
    # B=1000 -> tb=512, grid=(2,): exercises multi-step grid + batch padding.
    batch = 1000
    x = jax.random.normal(k_x, (batch, input_size), jnp.float32)
    out = jax.block_until_ready(mydnn_forward(x, slab))
    ref = reference_forward(x, params)
    assert out.shape == (batch, output_size)
    assert jnp.allclose(out, ref, atol=1e-4, rtol=1e-4), float(jnp.max(jnp.abs(out - ref)))

    # Tiny, non-128-aligned batch exercises the single-tile padding path.
    x_small = x[:7]
    out_small = jax.block_until_ready(mydnn_forward(x_small, slab))
    assert out_small.shape == (7, output_size)
    assert jnp.allclose(out_small, ref[:7], atol=1e-4, rtol=1e-4)

    print("KERNEL_OK")
</pallas_src>

<mosaic_0001>
module attributes {stable_mosaic.version = 11 : i64} {
  func.func @mlp_kernel(%arg0: i32, %arg1: memref<10x512xf32, #tpu.memory_space<vmem>>, %arg2: memref<288x128xf32, #tpu.memory_space<vmem>>, %arg3: memref<1x512xf32, #tpu.memory_space<vmem>>) attributes {dimension_semantics = [#tpu.dimension_semantics<parallel>], iteration_bounds = array<i64: 2>, scalar_prefetch = 0 : i64, scratch_operands = 0 : i64, tpu.core_type = #tpu.core_type<tc>, window_params = [{transform_indices = @transform_0, window_bounds = array<i64: 10, 512>}, {pipeline_mode = #tpu.pipeline_mode<synchronous>, transform_indices = @transform_1, window_bounds = array<i64: 288, 128>}, {transform_indices = @transform_2, window_bounds = array<i64: 1, 512>}]} {
    %c0 = arith.constant 0 : index
    %c0_0 = arith.constant 0 : index
    %0 = vector.load %arg1[%c0, %c0_0] : memref<10x512xf32, #tpu.memory_space<vmem>>, vector<10x512xf32>
    %c128 = arith.constant 128 : index
    %c0_1 = arith.constant 0 : index
    %1 = vector.load %arg2[%c128, %c0_1] : memref<288x128xf32, #tpu.memory_space<vmem>>, vector<10x128xf32>
    %c0_2 = arith.constant 0 : index
    %c0_3 = arith.constant 0 : index
    %2 = vector.load %arg2[%c0_2, %c0_3] : memref<288x128xf32, #tpu.memory_space<vmem>>, vector<128x128xf32>
    %c144 = arith.constant 144 : index
    %c0_4 = arith.constant 0 : index
    %3 = vector.load %arg2[%c144, %c0_4] : memref<288x128xf32, #tpu.memory_space<vmem>>, vector<8x128xf32>
    %c152 = arith.constant 152 : index
    %c0_5 = arith.constant 0 : index
    %4 = vector.load %arg2[%c152, %c0_5] : memref<288x128xf32, #tpu.memory_space<vmem>>, vector<1x1xf32>
    %c160 = arith.constant 160 : index
    %c0_6 = arith.constant 0 : index
    %5 = vector.load %arg2[%c160, %c0_6] : memref<288x128xf32, #tpu.memory_space<vmem>>, vector<128x1xf32>
    %c160_7 = arith.constant 160 : index
    %c1 = arith.constant 1 : index
    %6 = vector.load %arg2[%c160_7, %c1] : memref<288x128xf32, #tpu.memory_space<vmem>>, vector<128x1xf32>
    %cst = arith.constant dense<0.000000e+00> : vector<128x512xf32>
    %7 = tpu.matmul %1, %0, %cst {dimension_numbers = #tpu.dot_dimension_numbers<[0], [0], [1], [1], [0, 1, 1, 1], [], []>} : vector<10x128xf32>, vector<10x512xf32>, vector<128x512xf32> -> vector<128x512xf32>
    %8 = vector.broadcast %5 : vector<128x1xf32> to vector<128x512xf32>
    %9 = arith.addf %7, %8 : vector<128x512xf32>
    %cst_8 = arith.constant 0.000000e+00 : f32
    %10 = vector.broadcast %cst_8 : f32 to vector<128x512xf32>
    %11 = arith.maximumf %9, %10 : vector<128x512xf32>
    %cst_9 = arith.constant dense<0.000000e+00> : vector<128x512xf32>
    %12 = tpu.matmul %2, %11, %cst_9 {dimension_numbers = #tpu.dot_dimension_numbers<[1], [0], [0], [1], [0, 0, 1, 1], [], []>} : vector<128x128xf32>, vector<128x512xf32>, vector<128x512xf32> -> vector<128x512xf32>
    %13 = vector.broadcast %6 : vector<128x1xf32> to vector<128x512xf32>
    %14 = arith.addf %12, %13 : vector<128x512xf32>
    %cst_10 = arith.constant 0.000000e+00 : f32
    %15 = vector.broadcast %cst_10 : f32 to vector<128x512xf32>
    %16 = arith.maximumf %14, %15 : vector<128x512xf32>
    %cst_11 = arith.constant dense<0.000000e+00> : vector<8x512xf32>
    %17 = tpu.matmul %3, %16, %cst_11 {dimension_numbers = #tpu.dot_dimension_numbers<[1], [0], [0], [1], [0, 0, 1, 1], [], []>} : vector<8x128xf32>, vector<128x512xf32>, vector<8x512xf32> -> vector<8x512xf32>
    %18 = vector.extract_strided_slice %17 {offsets = [0, 0], sizes = [1, 512], strides = [1, 1]} : vector<8x512xf32> to vector<1x512xf32>
    %19 = vector.broadcast %4 : vector<1x1xf32> to vector<1x512xf32>
    %20 = arith.addf %18, %19 : vector<1x512xf32>
    %c0_12 = arith.constant 0 : index
    %c0_13 = arith.constant 0 : index
    %21 = vector.load %arg3[%c0_12, %c0_13] : memref<1x512xf32, #tpu.memory_space<vmem>>, vector<1x512xf32>
    tpu.vector_store %arg3[%c0_12, %c0_13], %20 {strides = array<i32>} : memref<1x512xf32, #tpu.memory_space<vmem>>, vector<1x512xf32>,
    return
  }
  func.func @transform_0(%arg0: i32) -> (i32, i32) {
    %c0_i32 = arith.constant 0 : i32
    %c0_i32_0 = arith.constant 0 : i32
    return %c0_i32, %arg0 : i32, i32
  }
  func.func @transform_1(%arg0: i32) -> (i32, i32) {
    %c0_i32 = arith.constant 0 : i32
    %c0_i32_0 = arith.constant 0 : i32
    %c0_i32_1 = arith.constant 0 : i32
    return %c0_i32, %c0_i32_0 : i32, i32
  }
  func.func @transform_2(%arg0: i32) -> (i32, i32) {
    %c0_i32 = arith.constant 0 : i32
    %c0_i32_0 = arith.constant 0 : i32
    return %c0_i32, %arg0 : i32, i32
  }
}

</mosaic_0001>

<llo_original>
// kernel: tpu_custom_call.1
$region0: #{tpu_custom_call.1}
  #allocation0 [shape = 'u32[]', space=smem, size = 0x4, offset = 0x4, fixed_abs, tag = 'smem constant byte address 0x4 - core index']
  #allocation1 [shape = 'u32[144,128]{1,0:T(1,128)}', space=vmem, size = 0x12000, scoped, tag = 'internal scratch']
  %s0 = inlined_call_operand.hbm [shape: f32[10,1024], index: 0, kind: input, shape index: {}]
  %s1 = inlined_call_operand.hbm [shape: f32[288,128], index: 1, kind: input, shape index: {}]
  %s2 = inlined_call_operand.hbm [shape: f32[1,1024], index: 2, kind: output, shape index: {}]
  %s3 = sld [smem:[#allocation0]]
  $region49: #{tpu_custom_call.1} parent=0
    _
  %s5 = ssub.s32 1, %s3
  %s6 = scalar_select 0, %s5, %s3
  $region1: #{tpu_custom_call.1} parent=0
    #allocation2 [shape = 'u8[65536]{0}', space=vmem, size = 0x10000, scoped, tag = 'input window, operand 0']
    #allocation3 [shape = 's32[2]{0}', space=sflag, size = 0x8, scoped, tag = 'scoped memory for tpu_custom_call.1']
    #allocation4 [shape = 's32[2]{0}', space=sflag, size = 0x8, scoped, tag = 'scoped memory for tpu_custom_call.1']
    #allocation5 [shape = 'u8[147456]{0}', space=vmem, size = 0x24000, scoped, tag = 'input window, operand 1, single buffered']
    #allocation6 [shape = 's32[1]{0}', space=sflag, size = 0x4, scoped, tag = 'scoped memory for tpu_custom_call.1']
    #allocation7 [shape = 'u8[4096]{0}', space=vmem, size = 0x1000, scoped, tag = 'output window, operand 0']
    %7 = vsyncpa [#allocation3], 0
    %s8 = scalar_lea.sflag [#allocation3], 1
    %9 = vsyncpa %s8, 0
    %10 = vsyncpa [#allocation6], 0
    %11 = vsyncpa [#allocation4], 0
    %s12 = scalar_lea.sflag [#allocation4], 1
    %13 = vsyncpa %s12, 0
    loop: start=0, step=1, limit=4
    $region2: #{tpu_custom_call.1} parent=1 // loop_pre_header
      _
    $region3: #{tpu_custom_call.1} parent=1 // loop_header
      %s15 = sphi 0, %s19
      %p16 = scmp.ge.s32.totalorder %s15, 4
      %s25 = sphi 0, %s27
      %s28 = sphi 0, %s25
      %s29 = sphi 0, %s28
      %s45 = sphi 0, %s29
      %s49 = sphi 0, %s49
      %s51 = sphi 0, %s49
      %s52 = sphi 0, %s51
      %s66 = sphi 0, %s52
      %s72 = sphi 0, %s74
      %s75 = sphi 0, %s72
      %s76 = sphi 0, %s75
      %s92 = sphi 0, %s76
    $region4: #{tpu_custom_call.1} parent=1 // loop_header_branch
      %18 = sbr.rel (%p16) target = $region8
    $region5: #{tpu_custom_call.1} parent=1 // loop_body
      %s20 = ssub.s32 %s15, 1
      %s21 = ssub.s32 %s15, 2
      %s22 = sadd.s32 %s15, 1
      %s23 = ssub.s32 %s15, %s22
      %p24 = scmp.eq.s32.totalorder %s23, 0
      %s26 = sadd.s32 %s25, 1
      %s27 = scalar_select %p24, %s25, %s26
      %p30 = pneg %p24
      %p31 = scmp.eq.s32.totalorder %s15, 1
      %p32 = por %p30, %p31
      %p33 = scmp.ne.s32.totalorder %s25, %s28
      %p34 = scmp.eq.s32.totalorder %s15, 0
      %p35 = por %p33, %p34
      %p36 = scmp.ne.s32.totalorder %s25, %s28
      %p37 = scmp.eq.s32.totalorder %s20, 1
      %p38 = por %p36, %p37
      %p39 = scmp.ne.s32.totalorder %s28, %s29
      %p40 = scmp.eq.s32.totalorder %s20, 0
      %p41 = por %p39, %p40
      %p42 = scmp.ne.s32.totalorder %s28, %s29
      %p43 = scmp.eq.s32.totalorder %s21, 1
      %p44 = por %p42, %p43
      %p46 = scmp.ne.s32.totalorder %s29, %s45
      %p47 = scmp.eq.s32.totalorder %s21, 0
      %p48 = por %p46, %p47
      %s50 = sadd.s32 %s49, 1
      %p53 = scmp.eq.s32.totalorder %s15, 1
      %p54 = scmp.ne.s32.totalorder %s49, %s51
      %p55 = scmp.eq.s32.totalorder %s15, 0
      %p56 = por %p54, %p55
      %p57 = scmp.ne.s32.totalorder %s49, %s51
      %p58 = scmp.eq.s32.totalorder %s20, 1
      %p59 = por %p57, %p58
      %p60 = scmp.ne.s32.totalorder %s51, %s52
      %p61 = scmp.eq.s32.totalorder %s20, 0
      %p62 = por %p60, %p61
      %p63 = scmp.ne.s32.totalorder %s51, %s52
      %p64 = scmp.eq.s32.totalorder %s21, 1
      %p65 = por %p63, %p64
      %p67 = scmp.ne.s32.totalorder %s52, %s66
      %p68 = scmp.eq.s32.totalorder %s21, 0
      %p69 = por %p67, %p68
      %s70 = ssub.s32 %s15, %s22
      %p71 = scmp.eq.s32.totalorder %s70, 0
      %s73 = sadd.s32 %s72, 1
      %s74 = scalar_select %p71, %s72, %s73
      %p77 = pneg %p71
      %p78 = scmp.eq.s32.totalorder %s15, 1
      %p79 = por %p77, %p78
      %p80 = scmp.ne.s32.totalorder %s72, %s75
      %p81 = scmp.eq.s32.totalorder %s15, 0
      %p82 = por %p80, %p81
      %p83 = scmp.ne.s32.totalorder %s72, %s75
      %p84 = scmp.eq.s32.totalorder %s20, 1
      %p85 = por %p83, %p84
      %p86 = scmp.ne.s32.totalorder %s75, %s76
      %p87 = scmp.eq.s32.totalorder %s20, 0
      %p88 = por %p86, %p87
      %p89 = scmp.ne.s32.totalorder %s75, %s76
      %p90 = scmp.eq.s32.totalorder %s21, 1
      %p91 = por %p89, %p90
      %p93 = scmp.ne.s32.totalorder %s76, %s92
      %p94 = scmp.eq.s32.totalorder %s21, 0
      %p95 = por %p93, %p94
      %p96 = scmp.le.s32.totalorder 1, %s15
      %p97 = scmp.lt.s32.totalorder %s15, 3
      %p98 = pnand %p96, %p97
      %p99 = pneg %p98
      // Predicated region
      $region9: #{tpu_custom_call.1} parent=5 // pred_check
        _
      $region10: #{tpu_custom_call.1} parent=5 // pred_check_branch
        %101 = sbr.rel (%p98) target = $region12
      $region11: #{tpu_custom_call.1} parent=5 // pred_region
        %s102 = ssub.s32 %s15, 1
        // Predicated region
        $region13: #{tpu_custom_call.1} parent=11 // pred_check
          %p103 = pneg %p62
        $region14: #{tpu_custom_call.1} parent=11 // pred_check_branch
          %105 = sbr.rel (%p103) target = $region16
        $region15: #{tpu_custom_call.1} parent=11 // pred_region
          %s107 = ssub.s32 4608, 4608
          %108 = vsyncadd [#allocation6], %s107
          %s109 = sshll.u32 [#allocation5], 4
          %s110 = int_to_ptr.vmem [resolvable:$true] %s109
          %115 = dma.hbm_to_vmem [thread:$0]  %s1, 4608, %s110, [#allocation6], 128, 128, 8
        $region16: #{tpu_custom_call.1} parent=11 // pred_fallthru
          _
      $region12: #{tpu_custom_call.1} parent=5 // pred_fallthru
        _
      %p116 = scmp.lt.s32.totalorder %s15, 2
      // Predicated region
      $region17: #{tpu_custom_call.1} parent=5 // pred_check
        %p117 = pneg %p116
      $region18: #{tpu_custom_call.1} parent=5 // pred_check_branch
        %119 = sbr.rel (%p117) target = $region20
      $region19: #{tpu_custom_call.1} parent=5 // pred_region
        // Predicated region
        $region21: #{tpu_custom_call.1} parent=19 // pred_check
          %p120 = pneg %p35
        $region22: #{tpu_custom_call.1} parent=19 // pred_check_branch
          %122 = sbr.rel (%p120) target = $region24
        $region23: #{tpu_custom_call.1} parent=19 // pred_region
          %s123 = sand.u32 %s25, 1
          %s124 = scalar_lea.sflag [#allocation3], %s123
          %s125 = sand.u32 %s25, 1
          %s126 = smul.addr %s125, 64
          %s127 = scalar_lea.vmem [#allocation2], %s126
          %s128 = smul.u32 4, %s15
          %s130 = ssub.s32 1024, 1024
          %131 = vsyncadd %s124, %s130
          %s132 = smul.addr %s128, 128
          %s133 = scalar_lea.hbm %s0, %s132
          %s134 = sshll.u32 %s127, 4
          %s135 = int_to_ptr.vmem [resolvable:$true] %s134
          %140 = dma.hbm_to_vmem [thread:$0]  %s133, 1024, %s135, %s124, 1024, 512, 32
        $region24: #{tpu_custom_call.1} parent=19 // pred_fallthru
          _
      $region20: #{tpu_custom_call.1} parent=5 // pred_fallthru
        _
      %p141 = scmp.le.s32.totalorder 1, %s15
      %p142 = scmp.lt.s32.totalorder %s15, 3
      %p143 = pnand %p141, %p142
      %p144 = pneg %p143
      // Predicated region
      $region25: #{tpu_custom_call.1} parent=5 // pred_check
        _
      $region26: #{tpu_custom_call.1} parent=5 // pred_check_branch
        %146 = sbr.rel (%p143) target = $region28
      $region27: #{tpu_custom_call.1} parent=5 // pred_region
        %s147 = ssub.s32 %s15, 1
        %s148 = sand.u32 %s28, 1
        %s149 = scalar_lea.sflag [#allocation3], %s148
        %s150 = sand.u32 %s28, 1
        %s151 = smul.addr %s150, 64
        %s152 = scalar_lea.vmem [#allocation2], %s151
        // Predicated region
        $region29: #{tpu_custom_call.1} parent=27 // pred_check
          %p153 = pneg %p41
        $region30: #{tpu_custom_call.1} parent=27 // pred_check_branch
          %155 = sbr.rel (%p153) target = $region32
        $region31: #{tpu_custom_call.1} parent=27 // pred_region
          %156 = dma.done %s149, 1024
        $region32: #{tpu_custom_call.1} parent=27 // pred_fallthru
          _
        // Predicated region
        $region33: #{tpu_custom_call.1} parent=27 // pred_check
          %p157 = pneg %p62
        $region34: #{tpu_custom_call.1} parent=27 // pred_check_branch
          %159 = sbr.rel (%p157) target = $region36
        $region35: #{tpu_custom_call.1} parent=27 // pred_region
          %160 = dma.done [#allocation6], 4608
        $region36: #{tpu_custom_call.1} parent=27 // pred_fallthru
          _
        %s161 = sand.u32 %s28, 1
        %s162 = scalar_lea.sflag [#allocation3], %s161
        %s163 = sand.u32 %s28, 1
        %s164 = smul.addr %s163, 64
        %s165 = scalar_lea.vmem [#allocation2], %s164
        %p166 = pneg %p41
        %p167 = pneg %p38
        %p168 = pneg %p62
        %p169 = pneg %p59
        %p170 = pneg %p88
        %p171 = pneg %p85
        %s172 = sand.u32 %s75, 1
        %s173 = scalar_lea.sflag [#allocation4], %s172
        %s174 = sand.u32 %s75, 1
        %s175 = smul.addr %s174, 4
        %s176 = scalar_lea.vmem [#allocation7], %s175
        %s177 = smul.u32 4, %s20
        %s178 = smul.u32 4, %s20
        %v179 = vld [vmem:[%s152] sm:$0xff]
        %v180 = vld [vmem:[%s152 + $0x8] sm:$0xff]
        %v181 = vld [vmem:[%s152 + $0x10] sm:$0xff]
        %v182 = vld [vmem:[%s152 + $0x18] sm:$0xff]
        %v183 = vld [vmem:[%s152 + $0x20] sm:$0x3]
        %v184 = vld [vmem:[%s152 + $0x28] sm:$0x3]
        %v185 = vld [vmem:[%s152 + $0x30] sm:$0x3]
        %v186 = vld [vmem:[%s152 + $0x38] sm:$0x3]
        %v187 = vld [vmem:[#allocation5 + $0x80] sm:$0xff]
        %v188 = vld [vmem:[#allocation5 + $0x88] sm:$0x3]
        %v189 = vld [vmem:[#allocation5] sm:$0xff]
        %v190 = vld [vmem:[#allocation5 + $0x8] sm:$0xff]
        %v191 = vld [vmem:[#allocation5 + $0x10] sm:$0xff]
        %v192 = vld [vmem:[#allocation5 + $0x18] sm:$0xff]
        %v193 = vld [vmem:[#allocation5 + $0x20] sm:$0xff]
        %v194 = vld [vmem:[#allocation5 + $0x28] sm:$0xff]
        %v195 = vld [vmem:[#allocation5 + $0x30] sm:$0xff]
        %v196 = vld [vmem:[#allocation5 + $0x38] sm:$0xff]
        %v197 = vld [vmem:[#allocation5 + $0x40] sm:$0xff]
        %v198 = vld [vmem:[#allocation5 + $0x48] sm:$0xff]
        %v199 = vld [vmem:[#allocation5 + $0x50] sm:$0xff]
        %v200 = vld [vmem:[#allocation5 + $0x58] sm:$0xff]
        %v201 = vld [vmem:[#allocation5 + $0x60] sm:$0xff]
        %v202 = vld [vmem:[#allocation5 + $0x68] sm:$0xff]
        %v203 = vld [vmem:[#allocation5 + $0x70] sm:$0xff]
        %v204 = vld [vmem:[#allocation5 + $0x78] sm:$0xff]
        %v205 = vld [vmem:[#allocation5 + $0x90] sm:$0xff]
        %v206 = vld [vmem:[#allocation5 + $0x98] sm:$0x1]
        %v207 = vld [vmem:[#allocation5 + $0xa0] sm:$0xff]
        %v208 = vld [vmem:[#allocation5 + $0xa8] sm:$0xff]
        %v209 = vld [vmem:[#allocation5 + $0xb0] sm:$0xff]
        %v210 = vld [vmem:[#allocation5 + $0xb8] sm:$0xff]
        %v211 = vld [vmem:[#allocation5 + $0xc0] sm:$0xff]
        %v212 = vld [vmem:[#allocation5 + $0xc8] sm:$0xff]
        %v213 = vld [vmem:[#allocation5 + $0xd0] sm:$0xff]
        %v214 = vld [vmem:[#allocation5 + $0xd8] sm:$0xff]
        %v215 = vld [vmem:[#allocation5 + $0xe0] sm:$0xff]
        %v216 = vld [vmem:[#allocation5 + $0xe8] sm:$0xff]
        %v217 = vld [vmem:[#allocation5 + $0xf0] sm:$0xff]
        %v218 = vld [vmem:[#allocation5 + $0xf8] sm:$0xff]
        %v219 = vld [vmem:[#allocation5 + $0x100] sm:$0xff]
        %v220 = vld [vmem:[#allocation5 + $0x108] sm:$0xff]
        %v221 = vld [vmem:[#allocation5 + $0x110] sm:$0xff]
        %v222 = vld [vmem:[#allocation5 + $0x118] sm:$0xff]
        %224 = vset.pattern.permute.xlu0 0
        %225 = vperm.xlu0 %224, %v207
        %v226 = vpop.permute.xlu0 %225
        %229 = vset.pattern.permute.xlu0 0
        %230 = vperm.xlu0 %229, %v208
        %v231 = vpop.permute.xlu0 %230
        %234 = vset.pattern.permute.xlu0 0
        %235 = vperm.xlu0 %234, %v209
        %v236 = vpop.permute.xlu0 %235
        %239 = vset.pattern.permute.xlu0 0
        %240 = vperm.xlu0 %239, %v210
        %v241 = vpop.permute.xlu0 %240
        %244 = vset.pattern.permute.xlu0 0
        %245 = vperm.xlu0 %244, %v211
        %v246 = vpop.permute.xlu0 %245
        %249 = vset.pattern.permute.xlu0 0
        %250 = vperm.xlu0 %249, %v212
        %v251 = vpop.permute.xlu0 %250
        %254 = vset.pattern.permute.xlu0 0
        %255 = vperm.xlu0 %254, %v213
        %v256 = vpop.permute.xlu0 %255
        %259 = vset.pattern.permute.xlu0 0
        %260 = vperm.xlu0 %259, %v214
        %v261 = vpop.permute.xlu0 %260
        %264 = vset.pattern.permute.xlu0 0
        %265 = vperm.xlu0 %264, %v215
        %v266 = vpop.permute.xlu0 %265
        %269 = vset.pattern.permute.xlu0 0
        %270 = vperm.xlu0 %269, %v216
        %v271 = vpop.permute.xlu0 %270
        %274 = vset.pattern.permute.xlu0 0
        %275 = vperm.xlu0 %274, %v217
        %v276 = vpop.permute.xlu0 %275
        %279 = vset.pattern.permute.xlu0 0
        %280 = vperm.xlu0 %279, %v218
        %v281 = vpop.permute.xlu0 %280
        %284 = vset.pattern.permute.xlu0 0
        %285 = vperm.xlu0 %284, %v219
        %v286 = vpop.permute.xlu0 %285
        %289 = vset.pattern.permute.xlu0 0
        %290 = vperm.xlu0 %289, %v220
        %v291 = vpop.permute.xlu0 %290
        %294 = vset.pattern.permute.xlu0 0
        %295 = vperm.xlu0 %294, %v221
        %v296 = vpop.permute.xlu0 %295
        %299 = vset.pattern.permute.xlu0 0
        %300 = vperm.xlu0 %299, %v222
        %v301 = vpop.permute.xlu0 %300
        %303 = vxpose.xlu0.b32.start [1/16] %v187, 128
        %304 = vxpose.xlu0.b32.cont [2/16] %v188, 128
        %305 = vxpose.xlu0.b32.cont [3/16] 0.0, 128
        %306 = vxpose.xlu0.b32.cont [4/16] 0.0, 128
        %307 = vxpose.xlu0.b32.cont [5/16] 0.0, 128
        %308 = vxpose.xlu0.b32.cont [6/16] 0.0, 128
        %309 = vxpose.xlu0.b32.cont [7/16] 0.0, 128
        %310 = vxpose.xlu0.b32.cont [8/16] 0.0, 128
        %311 = vxpose.xlu0.b32.cont [9/16] 0.0, 128
        %312 = vxpose.xlu0.b32.cont [10/16] 0.0, 128
        %313 = vxpose.xlu0.b32.cont [11/16] 0.0, 128
        %314 = vxpose.xlu0.b32.cont [12/16] 0.0, 128
        %315 = vxpose.xlu0.b32.cont [13/16] 0.0, 128
        %316 = vxpose.xlu0.b32.cont [14/16] 0.0, 128
        %317 = vxpose.xlu0.b32.cont [15/16] 0.0, 128
        %318 = vxpose.xlu0.b32.end [16/16] 0.0, 128
        %v319 = vpop.trf.xlu0
        %v320 = vpop.trf.xlu0
        %v321 = vpop.trf.xlu0
        %v322 = vpop.trf.xlu0
        %v323 = vpop.trf.xlu0
        %v324 = vpop.trf.xlu0
        %v325 = vpop.trf.xlu0
        %v326 = vpop.trf.xlu0
        %v327 = vpop.trf.xlu0
        %v328 = vpop.trf.xlu0
        %v329 = vpop.trf.xlu0
        %v330 = vpop.trf.xlu0
        %v331 = vpop.trf.xlu0
        %v332 = vpop.trf.xlu0
        %v333 = vpop.trf.xlu0
        %v334 = vpop.trf.xlu0
        %vm335 = vcmask 80896
        %v337 = vsel %vm335, %v319, 0
        %v340 = vsel %vm335, %v320, 0
        %v343 = vsel %vm335, %v321, 0
        %v346 = vsel %vm335, %v322, 0
        %v349 = vsel %vm335, %v323, 0
        %v352 = vsel %vm335, %v324, 0
        %v355 = vsel %vm335, %v325, 0
        %v358 = vsel %vm335, %v326, 0
        %v361 = vsel %vm335, %v327, 0
        %v364 = vsel %vm335, %v328, 0
        %v367 = vsel %vm335, %v329, 0
        %v370 = vsel %vm335, %v330, 0
        %v373 = vsel %vm335, %v331, 0
        %v376 = vsel %vm335, %v332, 0
        %v379 = vsel %vm335, %v333, 0
        %v382 = vsel %vm335, %v334, 0
        %vm384 = vcmask 1041408
        %v386 = vsel %vm384, %v183, 0
        %v389 = vsel %vm384, %v184, 0
        %v392 = vsel %vm384, %v185, 0
        %v395 = vsel %vm384, %v186, 0
        %397 = vmatprep.subr.mxu0 0.0
        %398 = vmatpush1.msra.mxu0 0.0
        %399 = vmatprep.subr.mxu0 0.0
        %400 = vmatpush1.msra.mxu0 0.0
        %401 = vmatprep.subr.mxu0 0.0
        %402 = vmatpush1.msra.mxu0 0.0
        %403 = vmatprep.subr.mxu0 0.0
        %404 = vmatpush1.msra.mxu0 0.0
        %405 = vmatprep.subr.mxu0 0.0
        %406 = vmatpush1.msra.mxu0 0.0
        %407 = vmatprep.subr.mxu0 0.0
        %408 = vmatpush1.msra.mxu0 0.0
        %409 = vmatprep.subr.mxu0 0.0
        %410 = vmatpush1.msra.mxu0 0.0
        %411 = vmatprep.subr.mxu0 0.0
        %412 = vmatpush1.msra.mxu0 0.0
        %413 = vmatprep.subr.mxu0 0.0
        %414 = vmatpush1.msra.mxu0 0.0
        %415 = vmatprep.subr.mxu0 0.0
        %416 = vmatpush1.msra.mxu0 0.0
        %417 = vmatprep.subr.mxu0 0.0
        %418 = vmatpush1.msra.mxu0 0.0
        %419 = vmatprep.subr.mxu0 0.0
        %420 = vmatpush1.msra.mxu0 0.0
        %421 = vmatprep.subr.mxu0 0.0
        %422 = vmatpush1.msra.mxu0 0.0
        %423 = vmatprep.subr.mxu0 0.0
        %424 = vmatpush1.msra.mxu0 0.0
        %425 = vmatprep.subr.mxu0 %v389
        %426 = vmatpush1.msra.mxu0 %v386
        %427 = vmatprep.subr.mxu0 %v180
        %428 = vmatpush1.msra.mxu0 %v179
        %429 = vmatprep.subr.mxu0 0.0
        %430 = vmatpush2.msra.mxu0 0.0
        %431 = vmatprep.subr.mxu0 0.0
        %432 = vmatpush2.msra.mxu0 0.0
        %433 = vmatprep.subr.mxu0 0.0
        %434 = vmatpush2.msra.mxu0 0.0
        %435 = vmatprep.subr.mxu0 0.0
        %436 = vmatpush2.msra.mxu0 0.0
        %437 = vmatprep.subr.mxu0 0.0
        %438 = vmatpush2.msra.mxu0 0.0
        %439 = vmatprep.subr.mxu0 0.0
        %440 = vmatpush2.msra.mxu0 0.0
        %441 = vmatprep.subr.mxu0 0.0
        %442 = vmatpush2.msra.mxu0 0.0
        %443 = vmatprep.subr.mxu0 0.0
        %444 = vmatpush2.msra.mxu0 0.0
        %445 = vmatprep.subr.mxu0 0.0
        %446 = vmatpush2.msra.mxu0 0.0
        %447 = vmatprep.subr.mxu0 0.0
        %448 = vmatpush2.msra.mxu0 0.0
        %449 = vmatprep.subr.mxu0 0.0
        %450 = vmatpush2.msra.mxu0 0.0
        %451 = vmatprep.subr.mxu0 0.0
        %452 = vmatpush2.msra.mxu0 0.0
        %453 = vmatprep.subr.mxu0 0.0
        %454 = vmatpush2.msra.mxu0 0.0
        %455 = vmatprep.subr.mxu0 0.0
        %456 = vmatpush2.msra.mxu0 0.0
        %457 = vmatprep.subr.mxu0 0.0
        %458 = vmatpush2.msra.mxu0 0.0
        %459 = vmatprep.subr.mxu0 0.0
        %460 = vmatpush2.msra.mxu0 0.0
        %461 = vmatprep.mubr.f32.mxu0 0.0
        %462 = vmatmul.mubr.f32.gmra.mxu0 %v337
        %v463 = vpop.f32.mrf.mxu0
        %v464 = vadd.f32 %v226, %v463
        %v465 = vpop.f32.mrf.mxu0
        %v466 = vadd.f32 %v226, %v465
        %467 = vmatprep.mubr.f32.mxu0 0.0
        %468 = vmatmul.mubr.f32.gmra.mxu0 %v340
        %v469 = vpop.f32.mrf.mxu0
        %v470 = vadd.f32 %v231, %v469
        %v471 = vpop.f32.mrf.mxu0
        %v472 = vadd.f32 %v231, %v471
        %473 = vmatprep.mubr.f32.mxu0 0.0
        %474 = vmatmul.mubr.f32.gmra.mxu0 %v343
        %v475 = vpop.f32.mrf.mxu0
        %v476 = vadd.f32 %v236, %v475
        %v477 = vpop.f32.mrf.mxu0
        %v478 = vadd.f32 %v236, %v477
        %479 = vmatprep.mubr.f32.mxu0 0.0
        %480 = vmatmul.mubr.f32.gmra.mxu0 %v346
        %v481 = vpop.f32.mrf.mxu0
        %v482 = vadd.f32 %v241, %v481
        %v483 = vpop.f32.mrf.mxu0
        %v484 = vadd.f32 %v241, %v483
        %485 = vmatprep.mubr.f32.mxu0 0.0
        %486 = vmatmul.mubr.f32.gmra.mxu0 %v349
        %v487 = vpop.f32.mrf.mxu0
        %v488 = vadd.f32 %v246, %v487
        %v489 = vpop.f32.mrf.mxu0
        %v490 = vadd.f32 %v246, %v489
        %491 = vmatprep.mubr.f32.mxu0 0.0
        %492 = vmatmul.mubr.f32.gmra.mxu0 %v352
        %v493 = vpop.f32.mrf.mxu0
        %v494 = vadd.f32 %v251, %v493
        %v495 = vpop.f32.mrf.mxu0
        %v496 = vadd.f32 %v251, %v495
        %497 = vmatprep.mubr.f32.mxu0 0.0
        %498 = vmatmul.mubr.f32.gmra.mxu0 %v355
        %v499 = vpop.f32.mrf.mxu0
        %v500 = vadd.f32 %v256, %v499
        %v501 = vpop.f32.mrf.mxu0
        %v502 = vadd.f32 %v256, %v501
        %503 = vmatprep.mubr.f32.mxu0 0.0
        %504 = vmatmul.mubr.f32.gmra.mxu0 %v358
        %v505 = vpop.f32.mrf.mxu0
        %v506 = vadd.f32 %v261, %v505
        %v507 = vpop.f32.mrf.mxu0
        %v508 = vadd.f32 %v261, %v507
        %509 = vmatprep.mubr.f32.mxu0 0.0
        %510 = vmatmul.mubr.f32.gmra.mxu0 %v361
        %v511 = vpop.f32.mrf.mxu0
        %v512 = vadd.f32 %v266, %v511
        %v513 = vpop.f32.mrf.mxu0
        %v514 = vadd.f32 %v266, %v513
        %515 = vmatprep.mubr.f32.mxu0 0.0
        %516 = vmatmul.mubr.f32.gmra.mxu0 %v364
        %v517 = vpop.f32.mrf.mxu0
        %v518 = vadd.f32 %v271, %v517
        %v519 = vpop.f32.mrf.mxu0
        %v520 = vadd.f32 %v271, %v519
        %521 = vmatprep.mubr.f32.mxu0 0.0
        %522 = vmatmul.mubr.f32.gmra.mxu0 %v367
        %v523 = vpop.f32.mrf.mxu0
        %v524 = vadd.f32 %v276, %v523
        %v525 = vpop.f32.mrf.mxu0
        %v526 = vadd.f32 %v276, %v525
        %527 = vmatprep.mubr.f32.mxu0 0.0
        %528 = vmatmul.mubr.f32.gmra.mxu0 %v370
        %v529 = vpop.f32.mrf.mxu0
        %v530 = vadd.f32 %v281, %v529
        %v531 = vpop.f32.mrf.mxu0
        %v532 = vadd.f32 %v281, %v531
        %533 = vmatprep.mubr.f32.mxu0 0.0
        %534 = vmatmul.mubr.f32.gmra.mxu0 %v373
        %v535 = vpop.f32.mrf.mxu0
        %v536 = vadd.f32 %v286, %v535
        %v537 = vpop.f32.mrf.mxu0
        %v538 = vadd.f32 %v286, %v537
        %539 = vmatprep.mubr.f32.mxu0 0.0
        %540 = vmatmul.mubr.f32.gmra.mxu0 %v376
        %v541 = vpop.f32.mrf.mxu0
        %v542 = vadd.f32 %v291, %v541
        %v543 = vpop.f32.mrf.mxu0
        %v544 = vadd.f32 %v291, %v543
        %545 = vmatprep.mubr.f32.mxu0 0.0
        %546 = vmatmul.mubr.f32.gmra.mxu0 %v379
        %v547 = vpop.f32.mrf.mxu0
        %v548 = vadd.f32 %v296, %v547
        %v549 = vpop.f32.mrf.mxu0
        %v550 = vadd.f32 %v296, %v549
        %551 = vmatprep.mubr.f32.mxu0 0.0
        %552 = vmatmul.mubr.f32.gmra.mxu0 %v382
        %v553 = vpop.f32.mrf.mxu0
        %v554 = vadd.f32 %v301, %v553
        %v555 = vpop.f32.mrf.mxu0
        %v556 = vadd.f32 %v301, %v555
        %557 = vdwg.mxu0
        %558 = vmatprep.subr.mxu0 0.0
        %559 = vmatpush1.msra.mxu0 0.0
        %560 = vmatprep.subr.mxu0 0.0
        %561 = vmatpush1.msra.mxu0 0.0
        %562 = vmatprep.subr.mxu0 0.0
        %563 = vmatpush1.msra.mxu0 0.0
        %564 = vmatprep.subr.mxu0 0.0
        %565 = vmatpush1.msra.mxu0 0.0
        %566 = vmatprep.subr.mxu0 0.0
        %567 = vmatpush1.msra.mxu0 0.0
        %568 = vmatprep.subr.mxu0 0.0
        %569 = vmatpush1.msra.mxu0 0.0
        %570 = vmatprep.subr.mxu0 0.0
        %571 = vmatpush1.msra.mxu0 0.0
        %572 = vmatprep.subr.mxu0 0.0
        %573 = vmatpush1.msra.mxu0 0.0
        %574 = vmatprep.subr.mxu0 0.0
        %575 = vmatpush1.msra.mxu0 0.0
        %576 = vmatprep.subr.mxu0 0.0
        %577 = vmatpush1.msra.mxu0 0.0
        %578 = vmatprep.subr.mxu0 0.0
        %579 = vmatpush1.msra.mxu0 0.0
        %580 = vmatprep.subr.mxu0 0.0
        %581 = vmatpush1.msra.mxu0 0.0
        %582 = vmatprep.subr.mxu0 0.0
        %583 = vmatpush1.msra.mxu0 0.0
        %584 = vmatprep.subr.mxu0 0.0
        %585 = vmatpush1.msra.mxu0 0.0
        %586 = vmatprep.subr.mxu0 %v395
        %587 = vmatpush1.msra.mxu0 %v392
        %588 = vmatprep.subr.mxu0 %v182
        %589 = vmatpush1.msra.mxu0 %v181
        %590 = vmatprep.subr.mxu0 0.0
        %591 = vmatpush2.msra.mxu0 0.0
        %592 = vmatprep.subr.mxu0 0.0
        %593 = vmatpush2.msra.mxu0 0.0
        %594 = vmatprep.subr.mxu0 0.0
        %595 = vmatpush2.msra.mxu0 0.0
        %596 = vmatprep.subr.mxu0 0.0
        %597 = vmatpush2.msra.mxu0 0.0
        %598 = vmatprep.subr.mxu0 0.0
        %599 = vmatpush2.msra.mxu0 0.0
        %600 = vmatprep.subr.mxu0 0.0
        %601 = vmatpush2.msra.mxu0 0.0
        %602 = vmatprep.subr.mxu0 0.0
        %603 = vmatpush2.msra.mxu0 0.0
        %604 = vmatprep.subr.mxu0 0.0
        %605 = vmatpush2.msra.mxu0 0.0
        %606 = vmatprep.subr.mxu0 0.0
        %607 = vmatpush2.msra.mxu0 0.0
        %608 = vmatprep.subr.mxu0 0.0
        %609 = vmatpush2.msra.mxu0 0.0
        %610 = vmatprep.subr.mxu0 0.0
        %611 = vmatpush2.msra.mxu0 0.0
        %612 = vmatprep.subr.mxu0 0.0
        %613 = vmatpush2.msra.mxu0 0.0
        %614 = vmatprep.subr.mxu0 0.0
        %615 = vmatpush2.msra.mxu0 0.0
        %616 = vmatprep.subr.mxu0 0.0
        %617 = vmatpush2.msra.mxu0 0.0
        %618 = vmatprep.subr.mxu0 0.0
        %619 = vmatpush2.msra.mxu0 0.0
        %620 = vmatprep.subr.mxu0 0.0
        %621 = vmatpush2.msra.mxu0 0.0
        %622 = vmatprep.mubr.f32.mxu0 0.0
        %623 = vmatmul.mubr.f32.gmra.mxu0 %v337
        %v624 = vpop.f32.mrf.mxu0
        %v625 = vadd.f32 %v226, %v624
        %v626 = vpop.f32.mrf.mxu0
        %v627 = vadd.f32 %v226, %v626
        %628 = vmatprep.mubr.f32.mxu0 0.0
        %629 = vmatmul.mubr.f32.gmra.mxu0 %v340
        %v630 = vpop.f32.mrf.mxu0
        %v631 = vadd.f32 %v231, %v630
        %v632 = vpop.f32.mrf.mxu0
        %v633 = vadd.f32 %v231, %v632
        %634 = vmatprep.mubr.f32.mxu0 0.0
        %635 = vmatmul.mubr.f32.gmra.mxu0 %v343
        %v636 = vpop.f32.mrf.mxu0
        %v637 = vadd.f32 %v236, %v636
        %v638 = vpop.f32.mrf.mxu0
        %v639 = vadd.f32 %v236, %v638
        %640 = vmatprep.mubr.f32.mxu0 0.0
        %641 = vmatmul.mubr.f32.gmra.mxu0 %v346
        %v642 = vpop.f32.mrf.mxu0
        %v643 = vadd.f32 %v241, %v642
        %v644 = vpop.f32.mrf.mxu0
        %v645 = vadd.f32 %v241, %v644
        %646 = vmatprep.mubr.f32.mxu0 0.0
        %647 = vmatmul.mubr.f32.gmra.mxu0 %v349
        %v648 = vpop.f32.mrf.mxu0
        %v649 = vadd.f32 %v246, %v648
        %v650 = vpop.f32.mrf.mxu0
        %v651 = vadd.f32 %v246, %v650
        %652 = vmatprep.mubr.f32.mxu0 0.0
        %653 = vmatmul.mubr.f32.gmra.mxu0 %v352
        %v654 = vpop.f32.mrf.mxu0
        %v655 = vadd.f32 %v251, %v654
        %v656 = vpop.f32.mrf.mxu0
        %v657 = vadd.f32 %v251, %v656
        %658 = vmatprep.mubr.f32.mxu0 0.0
        %659 = vmatmul.mubr.f32.gmra.mxu0 %v355
        %v660 = vpop.f32.mrf.mxu0
        %v661 = vadd.f32 %v256, %v660
        %v662 = vpop.f32.mrf.mxu0
        %v663 = vadd.f32 %v256, %v662
        %664 = vmatprep.mubr.f32.mxu0 0.0
        %665 = vmatmul.mubr.f32.gmra.mxu0 %v358
        %v666 = vpop.f32.mrf.mxu0
        %v667 = vadd.f32 %v261, %v666
        %v668 = vpop.f32.mrf.mxu0
        %v669 = vadd.f32 %v261, %v668
        %670 = vmatprep.mubr.f32.mxu0 0.0
        %671 = vmatmul.mubr.f32.gmra.mxu0 %v361
        %v672 = vpop.f32.mrf.mxu0
        %v673 = vadd.f32 %v266, %v672
        %v674 = vpop.f32.mrf.mxu0
        %v675 = vadd.f32 %v266, %v674
        %676 = vmatprep.mubr.f32.mxu0 0.0
        %677 = vmatmul.mubr.f32.gmra.mxu0 %v364
        %v678 = vpop.f32.mrf.mxu0
        %v679 = vadd.f32 %v271, %v678
        %v680 = vpop.f32.mrf.mxu0
        %v681 = vadd.f32 %v271, %v680
        %682 = vmatprep.mubr.f32.mxu0 0.0
        %683 = vmatmul.mubr.f32.gmra.mxu0 %v367
        %v684 = vpop.f32.mrf.mxu0
        %v685 = vadd.f32 %v276, %v684
        %v686 = vpop.f32.mrf.mxu0
        %v687 = vadd.f32 %v276, %v686
        %688 = vmatprep.mubr.f32.mxu0 0.0
        %689 = vmatmul.mubr.f32.gmra.mxu0 %v370
        %v690 = vpop.f32.mrf.mxu0
        %v691 = vadd.f32 %v281, %v690
        %v692 = vpop.f32.mrf.mxu0
        %v693 = vadd.f32 %v281, %v692
        %694 = vmatprep.mubr.f32.mxu0 0.0
        %695 = vmatmul.mubr.f32.gmra.mxu0 %v373
        %v696 = vpop.f32.mrf.mxu0
        %v697 = vadd.f32 %v286, %v696
        %v698 = vpop.f32.mrf.mxu0
        %v699 = vadd.f32 %v286, %v698
        %700 = vmatprep.mubr.f32.mxu0 0.0
        %701 = vmatmul.mubr.f32.gmra.mxu0 %v376
        %v702 = vpop.f32.mrf.mxu0
        %v703 = vadd.f32 %v291, %v702
        %v704 = vpop.f32.mrf.mxu0
        %v705 = vadd.f32 %v291, %v704
        %706 = vmatprep.mubr.f32.mxu0 0.0
        %707 = vmatmul.mubr.f32.gmra.mxu0 %v379
        %v708 = vpop.f32.mrf.mxu0
        %v709 = vadd.f32 %v296, %v708
        %v710 = vpop.f32.mrf.mxu0
        %v711 = vadd.f32 %v296, %v710
        %712 = vmatprep.mubr.f32.mxu0 0.0
        %713 = vmatmul.mubr.f32.gmra.mxu0 %v382
        %v714 = vpop.f32.mrf.mxu0
        %v715 = vadd.f32 %v301, %v714
        %v716 = vpop.f32.mrf.mxu0
        %v717 = vadd.f32 %v301, %v716
        %718 = vdwg.mxu0
        %v719 = vmax.f32 %v464, 0.0
        %v720 = vmax.f32 %v466, 0.0
        %v721 = vmax.f32 %v625, 0.0
        %v722 = vmax.f32 %v627, 0.0
        %v723 = vmax.f32 %v470, 0.0
        %v724 = vmax.f32 %v472, 0.0
        %v725 = vmax.f32 %v631, 0.0
        %v726 = vmax.f32 %v633, 0.0
        %v727 = vmax.f32 %v476, 0.0
        %v728 = vmax.f32 %v478, 0.0
        %v729 = vmax.f32 %v637, 0.0
        %v730 = vmax.f32 %v639, 0.0
        %v731 = vmax.f32 %v482, 0.0
        %v732 = vmax.f32 %v484, 0.0
        %v733 = vmax.f32 %v643, 0.0
        %v734 = vmax.f32 %v645, 0.0
        %v735 = vmax.f32 %v488, 0.0
        %v736 = vmax.f32 %v490, 0.0
        %v737 = vmax.f32 %v649, 0.0
        %v738 = vmax.f32 %v651, 0.0
        %v739 = vmax.f32 %v494, 0.0
        %v740 = vmax.f32 %v496, 0.0
        %v741 = vmax.f32 %v655, 0.0
        %v742 = vmax.f32 %v657, 0.0
        %v743 = vmax.f32 %v500, 0.0
        %v744 = vmax.f32 %v502, 0.0
        %v745 = vmax.f32 %v661, 0.0
        %v746 = vmax.f32 %v663, 0.0
        %v747 = vmax.f32 %v506, 0.0
        %v748 = vmax.f32 %v508, 0.0
        %v749 = vmax.f32 %v667, 0.0
        %v750 = vmax.f32 %v669, 0.0
        %v751 = vmax.f32 %v512, 0.0
        %v752 = vmax.f32 %v514, 0.0
        %v753 = vmax.f32 %v673, 0.0
        %v754 = vmax.f32 %v675, 0.0
        %v755 = vmax.f32 %v518, 0.0
        %v756 = vmax.f32 %v520, 0.0
        %v757 = vmax.f32 %v679, 0.0
        %v758 = vmax.f32 %v681, 0.0
        %v759 = vmax.f32 %v524, 0.0
        %v760 = vmax.f32 %v526, 0.0
        %v761 = vmax.f32 %v685, 0.0
        %v762 = vmax.f32 %v687, 0.0
        %v763 = vmax.f32 %v530, 0.0
        %v764 = vmax.f32 %v532, 0.0
        %v765 = vmax.f32 %v691, 0.0
        %v766 = vmax.f32 %v693, 0.0
        %v767 = vmax.f32 %v536, 0.0
        %v768 = vmax.f32 %v538, 0.0
        %v769 = vmax.f32 %v697, 0.0
        %v770 = vmax.f32 %v699, 0.0
        %v771 = vmax.f32 %v542, 0.0
        %v772 = vmax.f32 %v544, 0.0
        %v773 = vmax.f32 %v703, 0.0
        %v774 = vmax.f32 %v705, 0.0
        %v775 = vmax.f32 %v548, 0.0
        %v776 = vmax.f32 %v550, 0.0
        %v777 = vmax.f32 %v709, 0.0
        %v778 = vmax.f32 %v711, 0.0
        %v779 = vmax.f32 %v554, 0.0
        %v780 = vmax.f32 %v556, 0.0
        %v781 = vmax.f32 %v715, 0.0
        %v782 = vmax.f32 %v717, 0.0
        %783 = vset.pattern.permute.xlu0 1
        %784 = vperm.xlu0 %783, %v207
        %v785 = vpop.permute.xlu0 %784
        %787 = vset.pattern.permute.xlu0 1
        %788 = vperm.xlu0 %787, %v208
        %v789 = vpop.permute.xlu0 %788
        %791 = vset.pattern.permute.xlu0 1
        %792 = vperm.xlu0 %791, %v209
        %v793 = vpop.permute.xlu0 %792
        %795 = vset.pattern.permute.xlu0 1
        %796 = vperm.xlu0 %795, %v210
        %v797 = vpop.permute.xlu0 %796
        %799 = vset.pattern.permute.xlu0 1
        %800 = vperm.xlu0 %799, %v211
        %v801 = vpop.permute.xlu0 %800
        %803 = vset.pattern.permute.xlu0 1
        %804 = vperm.xlu0 %803, %v212
        %v805 = vpop.permute.xlu0 %804
        %807 = vset.pattern.permute.xlu0 1
        %808 = vperm.xlu0 %807, %v213
        %v809 = vpop.permute.xlu0 %808
        %811 = vset.pattern.permute.xlu0 1
        %812 = vperm.xlu0 %811, %v214
        %v813 = vpop.permute.xlu0 %812
        %815 = vset.pattern.permute.xlu0 1
        %816 = vperm.xlu0 %815, %v215
        %v817 = vpop.permute.xlu0 %816
        %819 = vset.pattern.permute.xlu0 1
        %820 = vperm.xlu0 %819, %v216
        %v821 = vpop.permute.xlu0 %820
        %823 = vset.pattern.permute.xlu0 1
        %824 = vperm.xlu0 %823, %v217
        %v825 = vpop.permute.xlu0 %824
        %827 = vset.pattern.permute.xlu0 1
        %828 = vperm.xlu0 %827, %v218
        %v829 = vpop.permute.xlu0 %828
        %831 = vset.pattern.permute.xlu0 1
        %832 = vperm.xlu0 %831, %v219
        %v833 = vpop.permute.xlu0 %832
        %835 = vset.pattern.permute.xlu0 1
        %836 = vperm.xlu0 %835, %v220
        %v837 = vpop.permute.xlu0 %836
        %839 = vset.pattern.permute.xlu0 1
        %840 = vperm.xlu0 %839, %v221
        %v841 = vpop.permute.xlu0 %840
        %843 = vset.pattern.permute.xlu0 1
        %844 = vperm.xlu0 %843, %v222
        %v845 = vpop.permute.xlu0 %844
        %847 = vmatprep.subr.mxu0 %v780
        %848 = vmatpush1.msra.mxu0 %v779
        %849 = vmatprep.subr.mxu0 %v776
        %850 = vmatpush1.msra.mxu0 %v775
        %851 = vmatprep.subr.mxu0 %v772
        %852 = vmatpush1.msra.mxu0 %v771
        %853 = vmatprep.subr.mxu0 %v768
        %854 = vmatpush1.msra.mxu0 %v767
        %855 = vmatprep.subr.mxu0 %v764
        %856 = vmatpush1.msra.mxu0 %v763
        %857 = vmatprep.subr.mxu0 %v760
        %858 = vmatpush1.msra.mxu0 %v759
        %859 = vmatprep.subr.mxu0 %v756
        %860 = vmatpush1.msra.mxu0 %v755
        %861 = vmatprep.subr.mxu0 %v752
        %862 = vmatpush1.msra.mxu0 %v751
        %863 = vmatprep.subr.mxu0 %v748
        %864 = vmatpush1.msra.mxu0 %v747
        %865 = vmatprep.subr.mxu0 %v744
        %866 = vmatpush1.msra.mxu0 %v743
        %867 = vmatprep.subr.mxu0 %v740
        %868 = vmatpush1.msra.mxu0 %v739
        %869 = vmatprep.subr.mxu0 %v736
        %870 = vmatpush1.msra.mxu0 %v735
        %871 = vmatprep.subr.mxu0 %v732
        %872 = vmatpush1.msra.mxu0 %v731
        %873 = vmatprep.subr.mxu0 %v728
        %874 = vmatpush1.msra.mxu0 %v727
        %875 = vmatprep.subr.mxu0 %v724
        %876 = vmatpush1.msra.mxu0 %v723
        %877 = vmatprep.subr.mxu0 %v720
        %878 = vmatpush1.msra.mxu0 %v719
        %879 = vmatprep.subr.mxu0 0.0
        %880 = vmatpush2.msra.mxu0 0.0
        %881 = vmatprep.subr.mxu0 0.0
        %882 = vmatpush2.msra.mxu0 0.0
        %883 = vmatprep.subr.mxu0 0.0
        %884 = vmatpush2.msra.mxu0 0.0
        %885 = vmatprep.subr.mxu0 0.0
        %886 = vmatpush2.msra.mxu0 0.0
        %887 = vmatprep.subr.mxu0 0.0
        %888 = vmatpush2.msra.mxu0 0.0
        %889 = vmatprep.subr.mxu0 0.0
        %890 = vmatpush2.msra.mxu0 0.0
        %891 = vmatprep.subr.mxu0 0.0
        %892 = vmatpush2.msra.mxu0 0.0
        %893 = vmatprep.subr.mxu0 0.0
        %894 = vmatpush2.msra.mxu0 0.0
        %895 = vmatprep.subr.mxu0 0.0
        %896 = vmatpush2.msra.mxu0 0.0
        %897 = vmatprep.subr.mxu0 0.0
        %898 = vmatpush2.msra.mxu0 0.0
        %899 = vmatprep.subr.mxu0 0.0
        %900 = vmatpush2.msra.mxu0 0.0
        %901 = vmatprep.subr.mxu0 0.0
        %902 = vmatpush2.msra.mxu0 0.0
        %903 = vmatprep.subr.mxu0 0.0
        %904 = vmatpush2.msra.mxu0 0.0
        %905 = vmatprep.subr.mxu0 0.0
        %906 = vmatpush2.msra.mxu0 0.0
        %907 = vmatprep.subr.mxu0 0.0
        %908 = vmatpush2.msra.mxu0 0.0
        %909 = vmatprep.subr.mxu0 0.0
        %910 = vmatpush2.msra.mxu0 0.0
        %911 = vmatprep.mubr.f32.mxu0 0.0
        %912 = vmatmul.mubr.f32.gmra.mxu0 %v189
        %v913 = vpop.f32.mrf.mxu0
        %v914 = vadd.f32 %v785, %v913
        %v915 = vpop.f32.mrf.mxu0
        %v916 = vadd.f32 %v785, %v915
        %917 = vmatprep.mubr.f32.mxu0 0.0
        %918 = vmatmul.mubr.f32.gmra.mxu0 %v190
        %v919 = vpop.f32.mrf.mxu0
        %v920 = vadd.f32 %v789, %v919
        %v921 = vpop.f32.mrf.mxu0
        %v922 = vadd.f32 %v789, %v921
        %923 = vmatprep.mubr.f32.mxu0 0.0
        %924 = vmatmul.mubr.f32.gmra.mxu0 %v191
        %v925 = vpop.f32.mrf.mxu0
        %v926 = vadd.f32 %v793, %v925
        %v927 = vpop.f32.mrf.mxu0
        %v928 = vadd.f32 %v793, %v927
        %929 = vmatprep.mubr.f32.mxu0 0.0
        %930 = vmatmul.mubr.f32.gmra.mxu0 %v192
        %v931 = vpop.f32.mrf.mxu0
        %v932 = vadd.f32 %v797, %v931
        %v933 = vpop.f32.mrf.mxu0
        %v934 = vadd.f32 %v797, %v933
        %935 = vmatprep.mubr.f32.mxu0 0.0
        %936 = vmatmul.mubr.f32.gmra.mxu0 %v193
        %v937 = vpop.f32.mrf.mxu0
        %v938 = vadd.f32 %v801, %v937
        %v939 = vpop.f32.mrf.mxu0
        %v940 = vadd.f32 %v801, %v939
        %941 = vmatprep.mubr.f32.mxu0 0.0
        %942 = vmatmul.mubr.f32.gmra.mxu0 %v194
        %v943 = vpop.f32.mrf.mxu0
        %v944 = vadd.f32 %v805, %v943
        %v945 = vpop.f32.mrf.mxu0
        %v946 = vadd.f32 %v805, %v945
        %947 = vmatprep.mubr.f32.mxu0 0.0
        %948 = vmatmul.mubr.f32.gmra.mxu0 %v195
        %v949 = vpop.f32.mrf.mxu0
        %v950 = vadd.f32 %v809, %v949
        %v951 = vpop.f32.mrf.mxu0
        %v952 = vadd.f32 %v809, %v951
        %953 = vmatprep.mubr.f32.mxu0 0.0
        %954 = vmatmul.mubr.f32.gmra.mxu0 %v196
        %v955 = vpop.f32.mrf.mxu0
        %v956 = vadd.f32 %v813, %v955
        %v957 = vpop.f32.mrf.mxu0
        %v958 = vadd.f32 %v813, %v957
        %959 = vmatprep.mubr.f32.mxu0 0.0
        %960 = vmatmul.mubr.f32.gmra.mxu0 %v197
        %v961 = vpop.f32.mrf.mxu0
        %v962 = vadd.f32 %v817, %v961
        %v963 = vpop.f32.mrf.mxu0
        %v964 = vadd.f32 %v817, %v963
        %965 = vmatprep.mubr.f32.mxu0 0.0
        %966 = vmatmul.mubr.f32.gmra.mxu0 %v198
        %v967 = vpop.f32.mrf.mxu0
        %v968 = vadd.f32 %v821, %v967
        %v969 = vpop.f32.mrf.mxu0
        %v970 = vadd.f32 %v821, %v969
        %971 = vmatprep.mubr.f32.mxu0 0.0
        %972 = vmatmul.mubr.f32.gmra.mxu0 %v199
        %v973 = vpop.f32.mrf.mxu0
        %v974 = vadd.f32 %v825, %v973
        %v975 = vpop.f32.mrf.mxu0
        %v976 = vadd.f32 %v825, %v975
        %977 = vmatprep.mubr.f32.mxu0 0.0
        %978 = vmatmul.mubr.f32.gmra.mxu0 %v200
        %v979 = vpop.f32.mrf.mxu0
        %v980 = vadd.f32 %v829, %v979
        %v981 = vpop.f32.mrf.mxu0
        %v982 = vadd.f32 %v829, %v981
        %983 = vmatprep.mubr.f32.mxu0 0.0
        %984 = vmatmul.mubr.f32.gmra.mxu0 %v201
        %v985 = vpop.f32.mrf.mxu0
        %v986 = vadd.f32 %v833, %v985
        %v987 = vpop.f32.mrf.mxu0
        %v988 = vadd.f32 %v833, %v987
        %989 = vmatprep.mubr.f32.mxu0 0.0
        %990 = vmatmul.mubr.f32.gmra.mxu0 %v202
        %v991 = vpop.f32.mrf.mxu0
        %v992 = vadd.f32 %v837, %v991
        %v993 = vpop.f32.mrf.mxu0
        %v994 = vadd.f32 %v837, %v993
        %995 = vmatprep.mubr.f32.mxu0 0.0
        %996 = vmatmul.mubr.f32.gmra.mxu0 %v203
        %v997 = vpop.f32.mrf.mxu0
        %v998 = vadd.f32 %v841, %v997
        %v999 = vpop.f32.mrf.mxu0
        %v1000 = vadd.f32 %v841, %v999
        %1001 = vmatprep.mubr.f32.mxu0 0.0
        %1002 = vmatmul.mubr.f32.gmra.mxu0 %v204
        %v1003 = vpop.f32.mrf.mxu0
        %v1004 = vadd.f32 %v845, %v1003
        %v1005 = vpop.f32.mrf.mxu0
        %v1006 = vadd.f32 %v845, %v1005
        %1007 = vdwg.mxu0
        %1008 = vmatprep.subr.mxu0 %v782
        %1009 = vmatpush1.msra.mxu0 %v781
        %1010 = vmatprep.subr.mxu0 %v778
        %1011 = vmatpush1.msra.mxu0 %v777
        %1012 = vmatprep.subr.mxu0 %v774
        %1013 = vmatpush1.msra.mxu0 %v773
        %1014 = vmatprep.subr.mxu0 %v770
        %1015 = vmatpush1.msra.mxu0 %v769
        %1016 = vmatprep.subr.mxu0 %v766
        %1017 = vmatpush1.msra.mxu0 %v765
        %1018 = vmatprep.subr.mxu0 %v762
        %1019 = vmatpush1.msra.mxu0 %v761
        %1020 = vmatprep.subr.mxu0 %v758
        %1021 = vmatpush1.msra.mxu0 %v757
        %1022 = vmatprep.subr.mxu0 %v754
        %1023 = vmatpush1.msra.mxu0 %v753
        %1024 = vmatprep.subr.mxu0 %v750
        %1025 = vmatpush1.msra.mxu0 %v749
        %1026 = vmatprep.subr.mxu0 %v746
        %1027 = vmatpush1.msra.mxu0 %v745
        %1028 = vmatprep.subr.mxu0 %v742
        %1029 = vmatpush1.msra.mxu0 %v741
        %1030 = vmatprep.subr.mxu0 %v738
        %1031 = vmatpush1.msra.mxu0 %v737
        %1032 = vmatprep.subr.mxu0 %v734
        %1033 = vmatpush1.msra.mxu0 %v733
        %1034 = vmatprep.subr.mxu0 %v730
        %1035 = vmatpush1.msra.mxu0 %v729
        %1036 = vmatprep.subr.mxu0 %v726
        %1037 = vmatpush1.msra.mxu0 %v725
        %1038 = vmatprep.subr.mxu0 %v722
        %1039 = vmatpush1.msra.mxu0 %v721
        %1040 = vmatprep.subr.mxu0 0.0
        %1041 = vmatpush2.msra.mxu0 0.0
        %1042 = vmatprep.subr.mxu0 0.0
        %1043 = vmatpush2.msra.mxu0 0.0
        %1044 = vmatprep.subr.mxu0 0.0
        %1045 = vmatpush2.msra.mxu0 0.0
        %1046 = vmatprep.subr.mxu0 0.0
        %1047 = vmatpush2.msra.mxu0 0.0
        %1048 = vmatprep.subr.mxu0 0.0
        %1049 = vmatpush2.msra.mxu0 0.0
        %1050 = vmatprep.subr.mxu0 0.0
        %1051 = vmatpush2.msra.mxu0 0.0
        %1052 = vmatprep.subr.mxu0 0.0
        %1053 = vmatpush2.msra.mxu0 0.0
        %1054 = vmatprep.subr.mxu0 0.0
        %1055 = vmatpush2.msra.mxu0 0.0
        %1056 = vmatprep.subr.mxu0 0.0
        %1057 = vmatpush2.msra.mxu0 0.0
        %1058 = vmatprep.subr.mxu0 0.0
        %1059 = vmatpush2.msra.mxu0 0.0
        %1060 = vmatprep.subr.mxu0 0.0
        %1061 = vmatpush2.msra.mxu0 0.0
        %1062 = vmatprep.subr.mxu0 0.0
        %1063 = vmatpush2.msra.mxu0 0.0
        %1064 = vmatprep.subr.mxu0 0.0
        %1065 = vmatpush2.msra.mxu0 0.0
        %1066 = vmatprep.subr.mxu0 0.0
        %1067 = vmatpush2.msra.mxu0 0.0
        %1068 = vmatprep.subr.mxu0 0.0
        %1069 = vmatpush2.msra.mxu0 0.0
        %1070 = vmatprep.subr.mxu0 0.0
        %1071 = vmatpush2.msra.mxu0 0.0
        %1072 = vmatprep.mubr.f32.mxu0 0.0
        %1073 = vmatmul.mubr.f32.gmra.mxu0 %v189
        %v1074 = vpop.f32.mrf.mxu0
        %v1075 = vadd.f32 %v785, %v1074
        %v1076 = vpop.f32.mrf.mxu0
        %v1077 = vadd.f32 %v785, %v1076
        %1078 = vmatprep.mubr.f32.mxu0 0.0
        %1079 = vmatmul.mubr.f32.gmra.mxu0 %v190
        %v1080 = vpop.f32.mrf.mxu0
        %v1081 = vadd.f32 %v789, %v1080
        %v1082 = vpop.f32.mrf.mxu0
        %v1083 = vadd.f32 %v789, %v1082
        %1084 = vmatprep.mubr.f32.mxu0 0.0
        %1085 = vmatmul.mubr.f32.gmra.mxu0 %v191
        %v1086 = vpop.f32.mrf.mxu0
        %v1087 = vadd.f32 %v793, %v1086
        %v1088 = vpop.f32.mrf.mxu0
        %v1089 = vadd.f32 %v793, %v1088
        %1090 = vmatprep.mubr.f32.mxu0 0.0
        %1091 = vmatmul.mubr.f32.gmra.mxu0 %v192
        %v1092 = vpop.f32.mrf.mxu0
        %v1093 = vadd.f32 %v797, %v1092
        %v1094 = vpop.f32.mrf.mxu0
        %v1095 = vadd.f32 %v797, %v1094
        %1096 = vmatprep.mubr.f32.mxu0 0.0
        %1097 = vmatmul.mubr.f32.gmra.mxu0 %v193
        %v1098 = vpop.f32.mrf.mxu0
        %v1099 = vadd.f32 %v801, %v1098
        %v1100 = vpop.f32.mrf.mxu0
        %v1101 = vadd.f32 %v801, %v1100
        %1102 = vmatprep.mubr.f32.mxu0 0.0
        %1103 = vmatmul.mubr.f32.gmra.mxu0 %v194
        %v1104 = vpop.f32.mrf.mxu0
        %v1105 = vadd.f32 %v805, %v1104
        %v1106 = vpop.f32.mrf.mxu0
        %v1107 = vadd.f32 %v805, %v1106
        %1108 = vmatprep.mubr.f32.mxu0 0.0
        %1109 = vmatmul.mubr.f32.gmra.mxu0 %v195
        %v1110 = vpop.f32.mrf.mxu0
        %v1111 = vadd.f32 %v809, %v1110
        %v1112 = vpop.f32.mrf.mxu0
        %v1113 = vadd.f32 %v809, %v1112
        %1114 = vmatprep.mubr.f32.mxu0 0.0
        %1115 = vmatmul.mubr.f32.gmra.mxu0 %v196
        %v1116 = vpop.f32.mrf.mxu0
        %v1117 = vadd.f32 %v813, %v1116
        %v1118 = vpop.f32.mrf.mxu0
        %v1119 = vadd.f32 %v813, %v1118
        %1120 = vmatprep.mubr.f32.mxu0 0.0
        %1121 = vmatmul.mubr.f32.gmra.mxu0 %v197
        %v1122 = vpop.f32.mrf.mxu0
        %v1123 = vadd.f32 %v817, %v1122
        %v1124 = vpop.f32.mrf.mxu0
        %v1125 = vadd.f32 %v817, %v1124
        %1126 = vmatprep.mubr.f32.mxu0 0.0
        %1127 = vmatmul.mubr.f32.gmra.mxu0 %v198
        %v1128 = vpop.f32.mrf.mxu0
        %v1129 = vadd.f32 %v821, %v1128
        %v1130 = vpop.f32.mrf.mxu0
        %v1131 = vadd.f32 %v821, %v1130
        %1132 = vmatprep.mubr.f32.mxu0 0.0
        %1133 = vmatmul.mubr.f32.gmra.mxu0 %v199
        %v1134 = vpop.f32.mrf.mxu0
        %v1135 = vadd.f32 %v825, %v1134
        %v1136 = vpop.f32.mrf.mxu0
        %v1137 = vadd.f32 %v825, %v1136
        %1138 = vmatprep.mubr.f32.mxu0 0.0
        %1139 = vmatmul.mubr.f32.gmra.mxu0 %v200
        %v1140 = vpop.f32.mrf.mxu0
        %v1141 = vadd.f32 %v829, %v1140
        %v1142 = vpop.f32.mrf.mxu0
        %v1143 = vadd.f32 %v829, %v1142
        %1144 = vmatprep.mubr.f32.mxu0 0.0
        %1145 = vmatmul.mubr.f32.gmra.mxu0 %v201
        %v1146 = vpop.f32.mrf.mxu0
        %v1147 = vadd.f32 %v833, %v1146
        %v1148 = vpop.f32.mrf.mxu0
        %v1149 = vadd.f32 %v833, %v1148
        %1150 = vmatprep.mubr.f32.mxu0 0.0
        %1151 = vmatmul.mubr.f32.gmra.mxu0 %v202
        %v1152 = vpop.f32.mrf.mxu0
        %v1153 = vadd.f32 %v837, %v1152
        %v1154 = vpop.f32.mrf.mxu0
        %v1155 = vadd.f32 %v837, %v1154
        %1156 = vmatprep.mubr.f32.mxu0 0.0
        %1157 = vmatmul.mubr.f32.gmra.mxu0 %v203
        %v1158 = vpop.f32.mrf.mxu0
        %v1159 = vadd.f32 %v841, %v1158
        %v1160 = vpop.f32.mrf.mxu0
        %v1161 = vadd.f32 %v841, %v1160
        %1162 = vmatprep.mubr.f32.mxu0 0.0
        %1163 = vmatmul.mubr.f32.gmra.mxu0 %v204
        %v1164 = vpop.f32.mrf.mxu0
        %v1165 = vadd.f32 %v845, %v1164
        %v1166 = vpop.f32.mrf.mxu0
        %v1167 = vadd.f32 %v845, %v1166
        %1168 = vdwg.mxu0
        %v1169 = vmax.f32 %v914, 0.0
        %v1170 = vmax.f32 %v916, 0.0
        %v1171 = vmax.f32 %v1075, 0.0
        %v1172 = vmax.f32 %v1077, 0.0
        %v1173 = vmax.f32 %v920, 0.0
        %v1174 = vmax.f32 %v922, 0.0
        %v1175 = vmax.f32 %v1081, 0.0
        %v1176 = vmax.f32 %v1083, 0.0
        %v1177 = vmax.f32 %v926, 0.0
        %v1178 = vmax.f32 %v928, 0.0
        %v1179 = vmax.f32 %v1087, 0.0
        %v1180 = vmax.f32 %v1089, 0.0
        %v1181 = vmax.f32 %v932, 0.0
        %v1182 = vmax.f32 %v934, 0.0
        %v1183 = vmax.f32 %v1093, 0.0
        %v1184 = vmax.f32 %v1095, 0.0
        %v1185 = vmax.f32 %v938, 0.0
        %v1186 = vmax.f32 %v940, 0.0
        %v1187 = vmax.f32 %v1099, 0.0
        %v1188 = vmax.f32 %v1101, 0.0
        %v1189 = vmax.f32 %v944, 0.0
        %v1190 = vmax.f32 %v946, 0.0
        %v1191 = vmax.f32 %v1105, 0.0
        %v1192 = vmax.f32 %v1107, 0.0
        %v1193 = vmax.f32 %v950, 0.0
        %v1194 = vmax.f32 %v952, 0.0
        %v1195 = vmax.f32 %v1111, 0.0
        %v1196 = vmax.f32 %v1113, 0.0
        %v1197 = vmax.f32 %v956, 0.0
        %v1198 = vmax.f32 %v958, 0.0
        %v1199 = vmax.f32 %v1117, 0.0
        %v1200 = vmax.f32 %v1119, 0.0
        %v1201 = vmax.f32 %v962, 0.0
        %v1202 = vmax.f32 %v964, 0.0
        %v1203 = vmax.f32 %v1123, 0.0
        %v1204 = vmax.f32 %v1125, 0.0
        %v1205 = vmax.f32 %v968, 0.0
        %v1206 = vmax.f32 %v970, 0.0
        %v1207 = vmax.f32 %v1129, 0.0
        %v1208 = vmax.f32 %v1131, 0.0
        %v1209 = vmax.f32 %v974, 0.0
        %v1210 = vmax.f32 %v976, 0.0
        %v1211 = vmax.f32 %v1135, 0.0
        %v1212 = vmax.f32 %v1137, 0.0
        %v1213 = vmax.f32 %v980, 0.0
        %v1214 = vmax.f32 %v982, 0.0
        %v1215 = vmax.f32 %v1141, 0.0
        %v1216 = vmax.f32 %v1143, 0.0
        %v1217 = vmax.f32 %v986, 0.0
        %v1218 = vmax.f32 %v988, 0.0
        %v1219 = vmax.f32 %v1147, 0.0
        %v1220 = vmax.f32 %v1149, 0.0
        %v1221 = vmax.f32 %v992, 0.0
        %v1222 = vmax.f32 %v994, 0.0
        %v1223 = vmax.f32 %v1153, 0.0
        %v1224 = vmax.f32 %v1155, 0.0
        %v1225 = vmax.f32 %v998, 0.0
        %v1226 = vmax.f32 %v1000, 0.0
        %v1227 = vmax.f32 %v1159, 0.0
        %v1228 = vmax.f32 %v1161, 0.0
        %v1229 = vmax.f32 %v1004, 0.0
        %v1230 = vmax.f32 %v1006, 0.0
        %v1231 = vmax.f32 %v1165, 0.0
        %v1232 = vmax.f32 %v1167, 0.0
        %1233 = vmatprep.subr.mxu0 %v1230
        %1234 = vmatpush1.msra.mxu0 %v1229
        %1235 = vmatprep.subr.mxu0 %v1226
        %1236 = vmatpush1.msra.mxu0 %v1225
        %1237 = vmatprep.subr.mxu0 %v1222
        %1238 = vmatpush1.msra.mxu0 %v1221
        %1239 = vmatprep.subr.mxu0 %v1218
        %1240 = vmatpush1.msra.mxu0 %v1217
        %1241 = vmatprep.subr.mxu0 %v1214
        %1242 = vmatpush1.msra.mxu0 %v1213
        %1243 = vmatprep.subr.mxu0 %v1210
        %1244 = vmatpush1.msra.mxu0 %v1209
        %1245 = vmatprep.subr.mxu0 %v1206
        %1246 = vmatpush1.msra.mxu0 %v1205
        %1247 = vmatprep.subr.mxu0 %v1202
        %1248 = vmatpush1.msra.mxu0 %v1201
        %1249 = vmatprep.subr.mxu0 %v1198
        %1250 = vmatpush1.msra.mxu0 %v1197
        %1251 = vmatprep.subr.mxu0 %v1194
        %1252 = vmatpush1.msra.mxu0 %v1193
        %1253 = vmatprep.subr.mxu0 %v1190
        %1254 = vmatpush1.msra.mxu0 %v1189
        %1255 = vmatprep.subr.mxu0 %v1186
        %1256 = vmatpush1.msra.mxu0 %v1185
        %1257 = vmatprep.subr.mxu0 %v1182
        %1258 = vmatpush1.msra.mxu0 %v1181
        %1259 = vmatprep.subr.mxu0 %v1178
        %1260 = vmatpush1.msra.mxu0 %v1177
        %1261 = vmatprep.subr.mxu0 %v1174
        %1262 = vmatpush1.msra.mxu0 %v1173
        %1263 = vmatprep.subr.mxu0 %v1170
        %1264 = vmatpush1.msra.mxu0 %v1169
        %1265 = vmatprep.subr.mxu0 0.0
        %1266 = vmatpush2.msra.mxu0 0.0
        %1267 = vmatprep.subr.mxu0 0.0
        %1268 = vmatpush2.msra.mxu0 0.0
        %1269 = vmatprep.subr.mxu0 0.0
        %1270 = vmatpush2.msra.mxu0 0.0
        %1271 = vmatprep.subr.mxu0 0.0
        %1272 = vmatpush2.msra.mxu0 0.0
        %1273 = vmatprep.subr.mxu0 0.0
        %1274 = vmatpush2.msra.mxu0 0.0
        %1275 = vmatprep.subr.mxu0 0.0
        %1276 = vmatpush2.msra.mxu0 0.0
        %1277 = vmatprep.subr.mxu0 0.0
        %1278 = vmatpush2.msra.mxu0 0.0
        %1279 = vmatprep.subr.mxu0 0.0
        %1280 = vmatpush2.msra.mxu0 0.0
        %1281 = vmatprep.subr.mxu0 0.0
        %1282 = vmatpush2.msra.mxu0 0.0
        %1283 = vmatprep.subr.mxu0 0.0
        %1284 = vmatpush2.msra.mxu0 0.0
        %1285 = vmatprep.subr.mxu0 0.0
        %1286 = vmatpush2.msra.mxu0 0.0
        %1287 = vmatprep.subr.mxu0 0.0
        %1288 = vmatpush2.msra.mxu0 0.0
        %1289 = vmatprep.subr.mxu0 0.0
        %1290 = vmatpush2.msra.mxu0 0.0
        %1291 = vmatprep.subr.mxu0 0.0
        %1292 = vmatpush2.msra.mxu0 0.0
        %1293 = vmatprep.subr.mxu0 0.0
        %1294 = vmatpush2.msra.mxu0 0.0
        %1295 = vmatprep.subr.mxu0 0.0
        %1296 = vmatpush2.msra.mxu0 0.0
        %1297 = vmatprep.mubr.f32.mxu0 0.0
        %1298 = vmatmul.mubr.f32.gmra.mxu0 %v205
        %v1299 = vpop.f32.mrf.mxu0
        %v1300 = vadd.f32 0.0, %v1299
        %v1301 = vpop.f32.mrf.mxu0
        %v1302 = vadd.f32 0.0, %v1301
        %1303 = vdwg.mxu0
        %1304 = vmatprep.subr.mxu0 %v1232
        %1305 = vmatpush1.msra.mxu0 %v1231
        %1306 = vmatprep.subr.mxu0 %v1228
        %1307 = vmatpush1.msra.mxu0 %v1227
        %1308 = vmatprep.subr.mxu0 %v1224
        %1309 = vmatpush1.msra.mxu0 %v1223
        %1310 = vmatprep.subr.mxu0 %v1220
        %1311 = vmatpush1.msra.mxu0 %v1219
        %1312 = vmatprep.subr.mxu0 %v1216
        %1313 = vmatpush1.msra.mxu0 %v1215
        %1314 = vmatprep.subr.mxu0 %v1212
        %1315 = vmatpush1.msra.mxu0 %v1211
        %1316 = vmatprep.subr.mxu0 %v1208
        %1317 = vmatpush1.msra.mxu0 %v1207
        %1318 = vmatprep.subr.mxu0 %v1204
        %1319 = vmatpush1.msra.mxu0 %v1203
        %1320 = vmatprep.subr.mxu0 %v1200
        %1321 = vmatpush1.msra.mxu0 %v1199
        %1322 = vmatprep.subr.mxu0 %v1196
        %1323 = vmatpush1.msra.mxu0 %v1195
        %1324 = vmatprep.subr.mxu0 %v1192
        %1325 = vmatpush1.msra.mxu0 %v1191
        %1326 = vmatprep.subr.mxu0 %v1188
        %1327 = vmatpush1.msra.mxu0 %v1187
        %1328 = vmatprep.subr.mxu0 %v1184
        %1329 = vmatpush1.msra.mxu0 %v1183
        %1330 = vmatprep.subr.mxu0 %v1180
        %1331 = vmatpush1.msra.mxu0 %v1179
        %1332 = vmatprep.subr.mxu0 %v1176
        %1333 = vmatpush1.msra.mxu0 %v1175
        %1334 = vmatprep.subr.mxu0 %v1172
        %1335 = vmatpush1.msra.mxu0 %v1171
        %1336 = vmatprep.subr.mxu0 0.0
        %1337 = vmatpush2.msra.mxu0 0.0
        %1338 = vmatprep.subr.mxu0 0.0
        %1339 = vmatpush2.msra.mxu0 0.0
        %1340 = vmatprep.subr.mxu0 0.0
        %1341 = vmatpush2.msra.mxu0 0.0
        %1342 = vmatprep.subr.mxu0 0.0
        %1343 = vmatpush2.msra.mxu0 0.0
        %1344 = vmatprep.subr.mxu0 0.0
        %1345 = vmatpush2.msra.mxu0 0.0
        %1346 = vmatprep.subr.mxu0 0.0
        %1347 = vmatpush2.msra.mxu0 0.0
        %1348 = vmatprep.subr.mxu0 0.0
        %1349 = vmatpush2.msra.mxu0 0.0
        %1350 = vmatprep.subr.mxu0 0.0
        %1351 = vmatpush2.msra.mxu0 0.0
        %1352 = vmatprep.subr.mxu0 0.0
        %1353 = vmatpush2.msra.mxu0 0.0
        %1354 = vmatprep.subr.mxu0 0.0
        %1355 = vmatpush2.msra.mxu0 0.0
        %1356 = vmatprep.subr.mxu0 0.0
        %1357 = vmatpush2.msra.mxu0 0.0
        %1358 = vmatprep.subr.mxu0 0.0
        %1359 = vmatpush2.msra.mxu0 0.0
        %1360 = vmatprep.subr.mxu0 0.0
        %1361 = vmatpush2.msra.mxu0 0.0
        %1362 = vmatprep.subr.mxu0 0.0
        %1363 = vmatpush2.msra.mxu0 0.0
        %1364 = vmatprep.subr.mxu0 0.0
        %1365 = vmatpush2.msra.mxu0 0.0
        %1366 = vmatprep.subr.mxu0 0.0
        %1367 = vmatpush2.msra.mxu0 0.0
        %1368 = vmatprep.mubr.f32.mxu0 0.0
        %1369 = vmatmul.mubr.f32.gmra.mxu0 %v205
        %v1370 = vpop.f32.mrf.mxu0
        %v1371 = vadd.f32 0.0, %v1370
        %v1372 = vpop.f32.mrf.mxu0
        %v1373 = vadd.f32 0.0, %v1372
        %1374 = vdwg.mxu0
        %1376 = vset.pattern.permute.xlu0 0
        %1377 = vperm.xlu0 %1376, %v206
        %v1378 = vpop.permute.xlu0 %1377
        %v1380 = vadd.f32 %v1300, %v1378
        %v1381 = vadd.f32 %v1302, %v1378
        %v1382 = vadd.f32 %v1371, %v1378
        %v1383 = vadd.f32 %v1373, %v1378
        %v1388 = vcombine.low %v1380, %v1381
        %v1389 = vcombine.low %v1382, %v1383
        %v1391 = vunpack.c.l.s4 1966171168
        %v1392 = vunpack.c.0.s8 %v1391
        %v1393 = vlaneseq
        %v1394 = vshrl.u32 %v1393, 7
        %v1395 = vsub.s32 %v1392, %v1394
        %v1396 = vrot.slane %v1388, %v1395
        %v1398 = vunpack.c.l.s4 1966171168
        %v1399 = vunpack.c.0.s8 %v1398
        %v1400 = vlaneseq
        %v1401 = vshrl.u32 %v1400, 7
        %v1402 = vsub.s32 %v1399, %v1401
        %v1403 = vrot.slane %v1389, %v1402
        %v1404 = vcombine.low %v1396, %v1403
        %v1406 = vunpack.c.l.s4 1966171168
        %v1407 = vunpack.c.0.s8 %v1406
        %v1408 = vlaneseq
        %v1409 = vshrl.u32 %v1408, 7
        %v1410 = vsub.s32 %v1407, %v1409
        %v1411 = vrot.slane %v1404, %v1410
        %v1413 = vlaneseq
        %vm1414 = vcmp.ge.s32.totalorder %v1413, 0
        %vm1415 = vcmp.lt.s32.totalorder %v1413, 512
        %vm1416 = vmand %vm1414, %vm1415
        %1417 = vst.msk [vmem:[%s176] sm:$0xf] %vm1416, %v1411
        %s1418 = sand.u32 %s75, 1
        %s1419 = scalar_lea.sflag [#allocation4], %s1418
        %s1420 = sand.u32 %s75, 1
        %s1421 = smul.addr %s1420, 4
        %s1422 = scalar_lea.vmem [#allocation7], %s1421
        // Predicated region
        $region37: #{tpu_custom_call.1} parent=27 // pred_check
          %p1423 = pneg %p85
        $region38: #{tpu_custom_call.1} parent=27 // pred_check_branch
          %1425 = sbr.rel (%p1423) target = $region40
        $region39: #{tpu_custom_call.1} parent=27 // pred_region
          %s1426 = smul.u32 4, %s20
          %s1428 = ssub.s32 64, 64
          %1429 = vsyncadd %s1419, %s1428
          %s1430 = smul.addr %s1426, 16
          %s1431 = scalar_lea.hbm %s2, %s1430
          %s1433 = sshll.u32 %s1422, 4
          %s1434 = int_to_ptr.vmem [resolvable:$true] %s1433
          %1436 = dma.vmem_to_hbm [thread:$0]  %s1434, 64, %s1431, %s1419
        $region40: #{tpu_custom_call.1} parent=27 // pred_fallthru
          _
      $region28: #{tpu_custom_call.1} parent=5 // pred_fallthru
        _
      %p1437 = scmp.le.s32.totalorder 2, %s15
      // Predicated region
      $region41: #{tpu_custom_call.1} parent=5 // pred_check
        %p1438 = pneg %p1437
      $region42: #{tpu_custom_call.1} parent=5 // pred_check_branch
        %1440 = sbr.rel (%p1438) target = $region44
      $region43: #{tpu_custom_call.1} parent=5 // pred_region
        %s1441 = ssub.s32 %s15, 2
        // Predicated region
        $region45: #{tpu_custom_call.1} parent=43 // pred_check
          %p1442 = pneg %p91
        $region46: #{tpu_custom_call.1} parent=43 // pred_check_branch
          %1444 = sbr.rel (%p1442) target = $region48
        $region47: #{tpu_custom_call.1} parent=43 // pred_region
          %s1445 = sand.u32 %s76, 1
          %s1446 = scalar_lea.sflag [#allocation4], %s1445
          %s1447 = sand.u32 %s76, 1
          %s1448 = smul.addr %s1447, 4
          %s1449 = scalar_lea.vmem [#allocation7], %s1448
          %1450 = dma.done %s1446, 64
        $region48: #{tpu_custom_call.1} parent=43 // pred_fallthru
          _
      $region44: #{tpu_custom_call.1} parent=5 // pred_fallthru
        _
    $region6: #{tpu_custom_call.1} parent=1 // loop_footer
      %s19 = sadd.s32 1, %s15
    $region7: #{tpu_custom_call.1} parent=1 // loop_footer_branch
      %14 = sbr.rel target = $region3
    $region8: #{tpu_custom_call.1} parent=1 // loop_exit
      _
    %1451 = vsyncpa [#allocation3], 1
    %s1452 = scalar_lea.sflag [#allocation3], 1
    %1453 = vsyncpa %s1452, 1
    %1454 = vsyncpa [#allocation6], 1
    %1455 = vsyncpa [#allocation4], 1
    %s1456 = scalar_lea.sflag [#allocation4], 1
    %1457 = vsyncpa %s1456, 1

</llo_original>
